<compile_context>
chip_gen: v7x
topology: tpu7x:2x2x1
jax: 0.10.0
libtpu: 0.0.40
codegen_flags: <defaults>
</compile_context>

<pallas_src>
import functools

import numpy as np
import jax
import jax.numpy as jnp
from jax import lax
from jax.experimental import pallas as pl
from jax.experimental.pallas import tpu as pltpu

_CHUNK = 8  # rows per coalesced DMA (8 x 128 x f32 = 4 KiB per descriptor)


def _coalesce_runs(idx, chunk):
    """Decompose a gather index into (src_start, dst_start) copies covering every row once.

    Returns four int32 arrays: big_src/big_dst (each entry = one `chunk`-row copy) and
    sm_src/sm_dst (each entry = one single-row copy).  Consecutive source indices are
    merged into runs before chunking, so contiguous jagged segments become multi-row DMAs.
    """
    idx = np.asarray(idx, dtype=np.int64)
    m = int(idx.shape[0])
    breaks = np.flatnonzero(np.diff(idx) != 1) + 1 if m > 1 else np.zeros((0,), np.int64)
    starts = np.concatenate([[0], breaks])   # destination row where each run starts
    ends = np.concatenate([breaks, [m]])     # exclusive end of each run
    big_src, big_dst, sm_src, sm_dst = [], [], [], []
    for dst0, dst1 in zip(starts, ends):
        src0 = int(idx[dst0])
        run = int(dst1 - dst0)
        nfull = run // chunk
        for c in range(nfull):
            big_src.append(src0 + c * chunk)
            big_dst.append(int(dst0) + c * chunk)
        for r in range(nfull * chunk, run):
            sm_src.append(src0 + r)
            sm_dst.append(int(dst0) + r)
    return (np.asarray(big_src, np.int32), np.asarray(big_dst, np.int32),
            np.asarray(sm_src, np.int32), np.asarray(sm_dst, np.int32))


def _chunked_gather_kernel(big_src_ref, big_dst_ref, sm_src_ref, sm_dst_ref,
                           src_ref, out_ref, copy_sem, *, nb, ns, chunk, out_rows):
    """Run-coalesced row gather: out_ref[d:d+L, :] = src_ref[s:s+L, :] via HBM->HBM DMA.

    big_*_ref : SMEM (max(nb,1),) int32 -- src/dst row starts of `chunk`-row copies
    sm_*_ref  : SMEM (max(ns,1),) int32 -- src/dst rows of single-row copies
    src_ref   : HBM  (N, D)        (memory_space=pl.ANY, no auto-DMA)
    out_ref   : HBM  (out_rows, D) (memory_space=pl.ANY, written only by DMA)
    """

    def issue_big(i, carry):
        s = big_src_ref[i]
        d = big_dst_ref[i]
        pltpu.make_async_copy(src_ref.at[pl.ds(s, chunk)],
                              out_ref.at[pl.ds(d, chunk)],
                              copy_sem.at[0]).start()
        return carry

    def issue_small(i, carry):
        s = sm_src_ref[i]
        d = sm_dst_ref[i]
        pltpu.make_async_copy(src_ref.at[pl.ds(s, 1)],
                              out_ref.at[pl.ds(d, 1)],
                              copy_sem.at[0]).start()
        return carry

    # Static trip counts (host-side ints) -> unrolled issue loops; all copies run concurrently.
    if nb > 0:
        lax.fori_loop(0, nb, issue_big, 0, unroll=min(8, nb))
    if ns > 0:
        lax.fori_loop(0, ns, issue_small, 0, unroll=min(8, ns))

    # Single aggregated drain: DMA semaphores count bytes; nb*chunk + ns rows == out_rows,
    # so one wait whose descriptor covers the full (out_rows, D) output balances every copy.
    pltpu.make_async_copy(src_ref.at[pl.ds(0, out_rows)], out_ref, copy_sem.at[0]).wait()


def gather_rows(src, idx, *, chunk=_CHUNK):
    """out[k] = src[idx[k]] — run-coalesced HBM->HBM DMA row gather (no MXU/VALU, O(1) VMEM).

    Note: the chunk decomposition is data-dependent, so distinct (nb, ns) pairs recompile;
    production use would bucket the counts.
    """
    src = jnp.asarray(src)
    idx = np.asarray(idx, dtype=np.int64).reshape(-1)
    m = int(idx.shape[0])
    n, d = src.shape
    if m == 0:
        return jnp.zeros((0, d), dtype=src.dtype)
    assert idx.min() >= 0 and idx.max() < n and n < 2 ** 31
    # The aggregate-wait descriptor slices m rows of src; holds for an all-to-all split
    # (a destination never receives more rows than exist in the global pool).
    assert m <= n, "gather_rows drain descriptor assumes m <= n"

    big_src, big_dst, sm_src, sm_dst = _coalesce_runs(idx, chunk)
    nb, ns = int(big_src.shape[0]), int(sm_src.shape[0])

    def _smem(a):  # scalar-prefetch arrays must be non-empty; dummies are never read
        return jnp.asarray(a if a.shape[0] else np.zeros((1,), np.int32), dtype=jnp.int32)

    # TODO(synk): on v5e/v6e (128 MiB VMEM) a VMEM-staged vld-gather fast path for small
    # pools would remove descriptor overhead entirely; kept single-path for portability (v7x).
    kernel = functools.partial(_chunked_gather_kernel, nb=nb, ns=ns, chunk=chunk, out_rows=m)
    out = pl.pallas_call(
        kernel,
        out_shape=jax.ShapeDtypeStruct((m, d), src.dtype),
        grid_spec=pltpu.PrefetchScalarGridSpec(
            num_scalar_prefetch=4,                        # per-chunk metadata lives in SMEM
            grid=(1,),
            in_specs=[pl.BlockSpec(memory_space=pl.ANY)],     # src stays in HBM
            out_specs=pl.BlockSpec(memory_space=pl.ANY),      # out stays in HBM (DMA-written)
            scratch_shapes=[pltpu.SemaphoreType.DMA((1,))],
        ),
        compiler_params=pltpu.CompilerParams(
            dimension_semantics=("arbitrary",),
            vmem_limit_bytes=16 * 1024 * 1024,
        ),
    )(_smem(big_src), _smem(big_dst), _smem(sm_src), _smem(sm_dst), src)
    return out


def _recat_row_indices(lengths_2d, recat):
    """Row indices implementing fbgemm.permute_2D_sparse_data on the embedding rows.

    lengths_2d: (S, B) ints -- jagged segment lengths, segments laid out row-major
        (segment (s, b) = s * B + b) in the flat (num_rows, D) embedding tensor.
    recat: (S,) -- output segment-row s' reads input segment-row recat[s'].
    """
    S, B = np.asarray(lengths_2d).shape
    seg_len = np.asarray(lengths_2d).reshape(-1).astype(np.int64)
    seg_off = np.concatenate([[0], np.cumsum(seg_len)])
    chunks = []
    for s_out in range(S):
        s_in = int(recat[s_out])
        for b in range(B):
            seg = s_in * B + b
            chunks.append(np.arange(seg_off[seg], seg_off[seg] + seg_len[seg]))
    if not chunks:
        return np.zeros((0,), np.int64)
    return np.concatenate(chunks).astype(np.int64)


class SequenceEmbeddingsAllToAll:
    """Single-host simulation of torchrec's SequenceEmbeddingsAllToAll.

    The process group of size `world_size` is simulated in-process. The sender-side
    forward-recat permutation (fbgemm.permute_2D_sparse_data), the all-to-all slice
    offsets and the awaitable's unbucketize index_select are composed on the host into
    one index array, which is run-coalesced and executed as a single Pallas DMA row
    gather over the (simulated) global row pool.
    """

    def __init__(self, world_size, features_per_rank):
        self.world_size = int(world_size)
        self.features_per_rank = list(features_per_rank)
        # deterministic buffers, same construction as the nn.Module __init__
        self._forward_recat = []
        self._backward_recat = []
        for r in range(self.world_size):
            local_split = self.features_per_rank[r]
            fwd = [j + i * self.world_size
                   for j in range(self.world_size) for i in range(local_split)]
            bwd = [i + j * local_split
                   for i in range(local_split) for j in range(self.world_size)]
            self._forward_recat.append(np.asarray(fwd, dtype=np.int32))
            self._backward_recat.append(np.asarray(bwd, dtype=np.int32))  # backward only

    def forward(self, local_embs_per_rank, lengths_per_rank,
                input_splits_per_rank, output_splits_per_rank,
                unbucketize_permute_tensor=None, dest_rank=0):
        W = self.world_size
        del input_splits_per_rank  # receive-side splits implied by output splits in simulation

        # host-side composition: forward-recat ∘ a2a-slice (∘ unbucketize) -> one index array
        composed, base = [], 0
        for r in range(W):
            F = self.features_per_rank[r]
            lengths = np.asarray(lengths_per_rank[r]).reshape(F * W, -1)
            row_idx = _recat_row_indices(lengths, self._forward_recat[r])
            off = int(sum(output_splits_per_rank[r][:dest_rank]))
            sz = int(output_splits_per_rank[r][dest_rank])
            composed.append(row_idx[off:off + sz] + base)
            base += int(np.asarray(local_embs_per_rank[r]).shape[0])
        recv_idx = np.concatenate(composed) if composed else np.zeros((0,), np.int64)
        if unbucketize_permute_tensor is not None:
            # Coalescing runs after the permute; a fully random permute degrades runs to
            # single rows, which is the irreducible access pattern in that case.
            recv_idx = recv_idx[np.asarray(unbucketize_permute_tensor)]

        # TODO(synk): dist.all_to_all_single is a cross-device collective with no single-device
        # Pallas equivalent; simulated by exposing all ranks' rows as one HBM pool and gathering
        # only the rows the destination rank receives (real impl: make_async_remote_copy ring).
        all_src = jnp.concatenate([jnp.asarray(e) for e in local_embs_per_rank], axis=0)
        return gather_rows(all_src, recv_idx)


if __name__ == "__main__":
    W = 2                      # simulated process-group size
    features_per_rank = [2, 2]
    B = 2                      # batch size per rank
    D = 128                    # embedding dim (lane dense)

    # jagged lengths per rank, shape (local_features * W, B); chosen so contiguous runs
    # exceed the 8-row DMA chunk (exercises the coalesced path).
    lengths_per_rank = [
        np.array([[5, 4], [2, 3], [4, 5], [1, 2]], dtype=np.int32),  # 26 rows
        np.array([[4, 5], [3, 2], [5, 4], [2, 1]], dtype=np.int32),  # 26 rows
    ]
    n_rows = [int(l.sum()) for l in lengths_per_rank]

    key = jax.random.PRNGKey(0)
    k0, k1, kp = jax.random.split(key, 3)
    embs_per_rank = [
        jax.random.normal(k0, (n_rows[0], D), dtype=jnp.float32),
        jax.random.normal(k1, (n_rows[1], D), dtype=jnp.float32),
    ]

    # splits in rows: output_splits[r][j] = rows rank r sends to rank j
    output_splits_per_rank = []
    for r in range(W):
        F = features_per_rank[r]
        lr = lengths_per_rank[r]
        output_splits_per_rank.append(
            [int(lr[np.arange(F) * W + j, :].sum()) for j in range(W)])
    input_splits_per_rank = [
        [output_splits_per_rank[j][r] for j in range(W)] for r in range(W)
    ]

    dest = 0
    total_recv = sum(input_splits_per_rank[dest])
    unbucketize = np.asarray(jax.random.permutation(kp, total_recv), dtype=np.int32)

    a2a = SequenceEmbeddingsAllToAll(W, features_per_rank)

    def numpy_ref(unbucketize_perm):
        # pure numpy reference of the same forward semantics (non-composed path)
        pieces = []
        for r in range(W):
            idx = _recat_row_indices(lengths_per_rank[r], a2a._forward_recat[r])
            perm_r = np.asarray(embs_per_rank[r])[idx]
            off = sum(output_splits_per_rank[r][:dest])
            pieces.append(perm_r[off:off + output_splits_per_rank[r][dest]])
        ref = np.concatenate(pieces, axis=0)
        return ref[unbucketize_perm] if unbucketize_perm is not None else ref

    # Case 1 (unbucketize=None) exercises the coalesced multi-row DMA path;
    # case 2 (random permutation) exercises the single-row fallback path.
    for ub in (None, unbucketize):
        out = a2a.forward(embs_per_rank, lengths_per_rank,
                          input_splits_per_rank, output_splits_per_rank,
                          unbucketize_permute_tensor=ub, dest_rank=dest)
        out = jax.block_until_ready(out)
        ref = numpy_ref(ub)
        np.testing.assert_allclose(np.asarray(out), ref, rtol=1e-6, atol=1e-6)
        assert out.shape == (total_recv, D)

    print("KERNEL_OK")
</pallas_src>

<mosaic_0001>
module attributes {stable_mosaic.version = 11 : i64} {
  func.func @_chunked_gather_kernel(%arg0: i32, %arg1: memref<4xi32, #tpu.memory_space<smem>>, %arg2: memref<4xi32, #tpu.memory_space<smem>>, %arg3: memref<4xi32, #tpu.memory_space<smem>>, %arg4: memref<4xi32, #tpu.memory_space<smem>>, %arg5: memref<52x128xf32, #tpu.memory_space<any>>, %arg6: memref<36x128xf32, #tpu.memory_space<any>>, %arg7: memref<1x!tpu.dma_semaphore, #tpu.memory_space<semaphore_mem>>) attributes {dimension_semantics = [#tpu.dimension_semantics<arbitrary>], iteration_bounds = array<i64: 1>, scalar_prefetch = 4 : i64, scratch_operands = 1 : i64, tpu.core_type = #tpu.core_type<tc>, window_params = [{}, {}]} {
    %c0_i32 = arith.constant 0 : i32
    %0 = arith.index_cast %c0_i32 : i32 to index
    %1 = memref.load %arg1[%0] : memref<4xi32, #tpu.memory_space<smem>>
    %2 = arith.index_cast %c0_i32 : i32 to index
    %3 = memref.load %arg2[%2] : memref<4xi32, #tpu.memory_space<smem>>
    %c0_i32_0 = arith.constant 0 : i32
    %c0_i32_1 = arith.constant 0 : i32
    %4 = tpu.memref_slice %arg5[%1, %c0_i32_1] : memref<52x128xf32, #tpu.memory_space<any>> -> memref<8x128xf32, #tpu.memory_space<any>>
    %c0_i32_2 = arith.constant 0 : i32
    %5 = tpu.memref_slice %arg6[%3, %c0_i32_2] : memref<36x128xf32, #tpu.memory_space<any>> -> memref<8x128xf32, #tpu.memory_space<any>>
    %6 = tpu.memref_slice %arg7[%c0_i32_0] : memref<1x!tpu.dma_semaphore, #tpu.memory_space<semaphore_mem>> -> memref<1x!tpu.dma_semaphore, #tpu.memory_space<semaphore_mem>>
    %7 = tpu.memref_squeeze %6 : memref<1x!tpu.dma_semaphore, #tpu.memory_space<semaphore_mem>> -> memref<!tpu.dma_semaphore, #tpu.memory_space<semaphore_mem>>
    tpu.enqueue_dma source(%4 : memref<8x128xf32, #tpu.memory_space<any>>) target(%5 : memref<8x128xf32, #tpu.memory_space<any>>) target_semaphore(%7 : memref<!tpu.dma_semaphore, #tpu.memory_space<semaphore_mem>>)
    %c1_i32 = arith.constant 1 : i32
    %8 = arith.index_cast %c1_i32 : i32 to index
    %9 = memref.load %arg1[%8] : memref<4xi32, #tpu.memory_space<smem>>
    %10 = arith.index_cast %c1_i32 : i32 to index
    %11 = memref.load %arg2[%10] : memref<4xi32, #tpu.memory_space<smem>>
    %c0_i32_3 = arith.constant 0 : i32
    %c0_i32_4 = arith.constant 0 : i32
    %12 = tpu.memref_slice %arg5[%9, %c0_i32_4] : memref<52x128xf32, #tpu.memory_space<any>> -> memref<8x128xf32, #tpu.memory_space<any>>
    %c0_i32_5 = arith.constant 0 : i32
    %13 = tpu.memref_slice %arg6[%11, %c0_i32_5] : memref<36x128xf32, #tpu.memory_space<any>> -> memref<8x128xf32, #tpu.memory_space<any>>
    %14 = tpu.memref_slice %arg7[%c0_i32_3] : memref<1x!tpu.dma_semaphore, #tpu.memory_space<semaphore_mem>> -> memref<1x!tpu.dma_semaphore, #tpu.memory_space<semaphore_mem>>
    %15 = tpu.memref_squeeze %14 : memref<1x!tpu.dma_semaphore, #tpu.memory_space<semaphore_mem>> -> memref<!tpu.dma_semaphore, #tpu.memory_space<semaphore_mem>>
    tpu.enqueue_dma source(%12 : memref<8x128xf32, #tpu.memory_space<any>>) target(%13 : memref<8x128xf32, #tpu.memory_space<any>>) target_semaphore(%15 : memref<!tpu.dma_semaphore, #tpu.memory_space<semaphore_mem>>)
    %c2_i32 = arith.constant 2 : i32
    %16 = arith.index_cast %c2_i32 : i32 to index
    %17 = memref.load %arg1[%16] : memref<4xi32, #tpu.memory_space<smem>>
    %18 = arith.index_cast %c2_i32 : i32 to index
    %19 = memref.load %arg2[%18] : memref<4xi32, #tpu.memory_space<smem>>
    %c0_i32_6 = arith.constant 0 : i32
    %c0_i32_7 = arith.constant 0 : i32
    %20 = tpu.memref_slice %arg5[%17, %c0_i32_7] : memref<52x128xf32, #tpu.memory_space<any>> -> memref<8x128xf32, #tpu.memory_space<any>>
    %c0_i32_8 = arith.constant 0 : i32
    %21 = tpu.memref_slice %arg6[%19, %c0_i32_8] : memref<36x128xf32, #tpu.memory_space<any>> -> memref<8x128xf32, #tpu.memory_space<any>>
    %22 = tpu.memref_slice %arg7[%c0_i32_6] : memref<1x!tpu.dma_semaphore, #tpu.memory_space<semaphore_mem>> -> memref<1x!tpu.dma_semaphore, #tpu.memory_space<semaphore_mem>>
    %23 = tpu.memref_squeeze %22 : memref<1x!tpu.dma_semaphore, #tpu.memory_space<semaphore_mem>> -> memref<!tpu.dma_semaphore, #tpu.memory_space<semaphore_mem>>
    tpu.enqueue_dma source(%20 : memref<8x128xf32, #tpu.memory_space<any>>) target(%21 : memref<8x128xf32, #tpu.memory_space<any>>) target_semaphore(%23 : memref<!tpu.dma_semaphore, #tpu.memory_space<semaphore_mem>>)
    %c3_i32 = arith.constant 3 : i32
    %24 = arith.index_cast %c3_i32 : i32 to index
    %25 = memref.load %arg1[%24] : memref<4xi32, #tpu.memory_space<smem>>
    %26 = arith.index_cast %c3_i32 : i32 to index
    %27 = memref.load %arg2[%26] : memref<4xi32, #tpu.memory_space<smem>>
    %c0_i32_9 = arith.constant 0 : i32
    %c0_i32_10 = arith.constant 0 : i32
    %28 = tpu.memref_slice %arg5[%25, %c0_i32_10] : memref<52x128xf32, #tpu.memory_space<any>> -> memref<8x128xf32, #tpu.memory_space<any>>
    %c0_i32_11 = arith.constant 0 : i32
    %29 = tpu.memref_slice %arg6[%27, %c0_i32_11] : memref<36x128xf32, #tpu.memory_space<any>> -> memref<8x128xf32, #tpu.memory_space<any>>
    %30 = tpu.memref_slice %arg7[%c0_i32_9] : memref<1x!tpu.dma_semaphore, #tpu.memory_space<semaphore_mem>> -> memref<1x!tpu.dma_semaphore, #tpu.memory_space<semaphore_mem>>
    %31 = tpu.memref_squeeze %30 : memref<1x!tpu.dma_semaphore, #tpu.memory_space<semaphore_mem>> -> memref<!tpu.dma_semaphore, #tpu.memory_space<semaphore_mem>>
    tpu.enqueue_dma source(%28 : memref<8x128xf32, #tpu.memory_space<any>>) target(%29 : memref<8x128xf32, #tpu.memory_space<any>>) target_semaphore(%31 : memref<!tpu.dma_semaphore, #tpu.memory_space<semaphore_mem>>)
    %c4_i32 = arith.constant 4 : i32
    %c0_i32_12 = arith.constant 0 : i32
    %32 = arith.index_cast %c0_i32_12 : i32 to index
    %33 = memref.load %arg3[%32] : memref<4xi32, #tpu.memory_space<smem>>
    %34 = arith.index_cast %c0_i32_12 : i32 to index
    %35 = memref.load %arg4[%34] : memref<4xi32, #tpu.memory_space<smem>>
    %c0_i32_13 = arith.constant 0 : i32
    %c0_i32_14 = arith.constant 0 : i32
    %36 = tpu.memref_slice %arg5[%33, %c0_i32_14] : memref<52x128xf32, #tpu.memory_space<any>> -> memref<1x128xf32, #tpu.memory_space<any>>
    %c0_i32_15 = arith.constant 0 : i32
    %37 = tpu.memref_slice %arg6[%35, %c0_i32_15] : memref<36x128xf32, #tpu.memory_space<any>> -> memref<1x128xf32, #tpu.memory_space<any>>
    %38 = tpu.memref_slice %arg7[%c0_i32_13] : memref<1x!tpu.dma_semaphore, #tpu.memory_space<semaphore_mem>> -> memref<1x!tpu.dma_semaphore, #tpu.memory_space<semaphore_mem>>
    %39 = tpu.memref_squeeze %38 : memref<1x!tpu.dma_semaphore, #tpu.memory_space<semaphore_mem>> -> memref<!tpu.dma_semaphore, #tpu.memory_space<semaphore_mem>>
    tpu.enqueue_dma source(%36 : memref<1x128xf32, #tpu.memory_space<any>>) target(%37 : memref<1x128xf32, #tpu.memory_space<any>>) target_semaphore(%39 : memref<!tpu.dma_semaphore, #tpu.memory_space<semaphore_mem>>)
    %c1_i32_16 = arith.constant 1 : i32
    %40 = arith.index_cast %c1_i32_16 : i32 to index
    %41 = memref.load %arg3[%40] : memref<4xi32, #tpu.memory_space<smem>>
    %42 = arith.index_cast %c1_i32_16 : i32 to index
    %43 = memref.load %arg4[%42] : memref<4xi32, #tpu.memory_space<smem>>
    %c0_i32_17 = arith.constant 0 : i32
    %c0_i32_18 = arith.constant 0 : i32
    %44 = tpu.memref_slice %arg5[%41, %c0_i32_18] : memref<52x128xf32, #tpu.memory_space<any>> -> memref<1x128xf32, #tpu.memory_space<any>>
    %c0_i32_19 = arith.constant 0 : i32
    %45 = tpu.memref_slice %arg6[%43, %c0_i32_19] : memref<36x128xf32, #tpu.memory_space<any>> -> memref<1x128xf32, #tpu.memory_space<any>>
    %46 = tpu.memref_slice %arg7[%c0_i32_17] : memref<1x!tpu.dma_semaphore, #tpu.memory_space<semaphore_mem>> -> memref<1x!tpu.dma_semaphore, #tpu.memory_space<semaphore_mem>>
    %47 = tpu.memref_squeeze %46 : memref<1x!tpu.dma_semaphore, #tpu.memory_space<semaphore_mem>> -> memref<!tpu.dma_semaphore, #tpu.memory_space<semaphore_mem>>
    tpu.enqueue_dma source(%44 : memref<1x128xf32, #tpu.memory_space<any>>) target(%45 : memref<1x128xf32, #tpu.memory_space<any>>) target_semaphore(%47 : memref<!tpu.dma_semaphore, #tpu.memory_space<semaphore_mem>>)
    %c2_i32_20 = arith.constant 2 : i32
    %48 = arith.index_cast %c2_i32_20 : i32 to index
    %49 = memref.load %arg3[%48] : memref<4xi32, #tpu.memory_space<smem>>
    %50 = arith.index_cast %c2_i32_20 : i32 to index
    %51 = memref.load %arg4[%50] : memref<4xi32, #tpu.memory_space<smem>>
    %c0_i32_21 = arith.constant 0 : i32
    %c0_i32_22 = arith.constant 0 : i32
    %52 = tpu.memref_slice %arg5[%49, %c0_i32_22] : memref<52x128xf32, #tpu.memory_space<any>> -> memref<1x128xf32, #tpu.memory_space<any>>
    %c0_i32_23 = arith.constant 0 : i32
    %53 = tpu.memref_slice %arg6[%51, %c0_i32_23] : memref<36x128xf32, #tpu.memory_space<any>> -> memref<1x128xf32, #tpu.memory_space<any>>
    %54 = tpu.memref_slice %arg7[%c0_i32_21] : memref<1x!tpu.dma_semaphore, #tpu.memory_space<semaphore_mem>> -> memref<1x!tpu.dma_semaphore, #tpu.memory_space<semaphore_mem>>
    %55 = tpu.memref_squeeze %54 : memref<1x!tpu.dma_semaphore, #tpu.memory_space<semaphore_mem>> -> memref<!tpu.dma_semaphore, #tpu.memory_space<semaphore_mem>>
    tpu.enqueue_dma source(%52 : memref<1x128xf32, #tpu.memory_space<any>>) target(%53 : memref<1x128xf32, #tpu.memory_space<any>>) target_semaphore(%55 : memref<!tpu.dma_semaphore, #tpu.memory_space<semaphore_mem>>)
    %c3_i32_24 = arith.constant 3 : i32
    %56 = arith.index_cast %c3_i32_24 : i32 to index
    %57 = memref.load %arg3[%56] : memref<4xi32, #tpu.memory_space<smem>>
    %58 = arith.index_cast %c3_i32_24 : i32 to index
    %59 = memref.load %arg4[%58] : memref<4xi32, #tpu.memory_space<smem>>
    %c0_i32_25 = arith.constant 0 : i32
    %c0_i32_26 = arith.constant 0 : i32
    %60 = tpu.memref_slice %arg5[%57, %c0_i32_26] : memref<52x128xf32, #tpu.memory_space<any>> -> memref<1x128xf32, #tpu.memory_space<any>>
    %c0_i32_27 = arith.constant 0 : i32
    %61 = tpu.memref_slice %arg6[%59, %c0_i32_27] : memref<36x128xf32, #tpu.memory_space<any>> -> memref<1x128xf32, #tpu.memory_space<any>>
    %62 = tpu.memref_slice %arg7[%c0_i32_25] : memref<1x!tpu.dma_semaphore, #tpu.memory_space<semaphore_mem>> -> memref<1x!tpu.dma_semaphore, #tpu.memory_space<semaphore_mem>>
    %63 = tpu.memref_squeeze %62 : memref<1x!tpu.dma_semaphore, #tpu.memory_space<semaphore_mem>> -> memref<!tpu.dma_semaphore, #tpu.memory_space<semaphore_mem>>
    tpu.enqueue_dma source(%60 : memref<1x128xf32, #tpu.memory_space<any>>) target(%61 : memref<1x128xf32, #tpu.memory_space<any>>) target_semaphore(%63 : memref<!tpu.dma_semaphore, #tpu.memory_space<semaphore_mem>>)
    %c4_i32_28 = arith.constant 4 : i32
    %c0_i32_29 = arith.constant 0 : i32
    %c0_i32_30 = arith.constant 0 : i32
    %c0_i32_31 = arith.constant 0 : i32
    %64 = tpu.memref_slice %arg5[%c0_i32_30, %c0_i32_31] : memref<52x128xf32, #tpu.memory_space<any>> -> memref<36x128xf32, #tpu.memory_space<any>>
    %65 = tpu.memref_slice %arg7[%c0_i32_29] : memref<1x!tpu.dma_semaphore, #tpu.memory_space<semaphore_mem>> -> memref<1x!tpu.dma_semaphore, #tpu.memory_space<semaphore_mem>>
    %66 = tpu.memref_squeeze %65 : memref<1x!tpu.dma_semaphore, #tpu.memory_space<semaphore_mem>> -> memref<!tpu.dma_semaphore, #tpu.memory_space<semaphore_mem>>
    tpu.wait_dma2 semaphore(%66 : memref<!tpu.dma_semaphore, #tpu.memory_space<semaphore_mem>>) src(%64 : memref<36x128xf32, #tpu.memory_space<any>>) dst(%arg6 : memref<36x128xf32, #tpu.memory_space<any>>)
    return
  }
}

</mosaic_0001>

<llo_original>
// kernel: tpu_custom_call.1
$region0: #{tpu_custom_call.1}
  #allocation0 [shape = 'u32[]', space=smem, size = 0x4, offset = 0x4, fixed_abs, tag = 'smem constant byte address 0x4 - core index']
  #allocation1 [shape = 'u32[144,128]{1,0:T(1,128)}', space=vmem, size = 0x12000, scoped, tag = 'internal scratch']
  #allocation2 [shape = 's32[1]{0}', space=sflag, size = 0x4, scoped, tag = 'scratch operand']
  #allocation3 [shape = 's32[1]{0}', space=sflag, size = 0x4, scoped, tag = 'scoped memory for tpu_custom_call.1']
  #allocation4 [shape = 'u8[512]{0}', space=smem, size = 0x200, scoped, tag = 'prefetched SMEM operand 0']
  #allocation5 [shape = 'u8[512]{0}', space=smem, size = 0x200, scoped, tag = 'prefetched SMEM operand 1']
  #allocation6 [shape = 'u8[512]{0}', space=smem, size = 0x200, scoped, tag = 'prefetched SMEM operand 2']
  #allocation7 [shape = 'u8[512]{0}', space=smem, size = 0x200, scoped, tag = 'prefetched SMEM operand 3']
  #allocation8 [shape = 's32[]', space=sflag, size = 0x4, offset = 0, fixed_abs, tag = 'sflag constant byte address 0x0 - dummy sync flag']
  #allocation9 [shape = 'u32[0]{0}', space=smem, size = 0, offset = 0, fixed_abs, tag = 'smem constant byte address 0x0 - null']
  #allocation10 [shape = 's32[]', space=sflag, size = 0x4, offset = 0, fixed_abs, tag = 'sflag constant byte address 0x0 - dummy sync flag']
  #allocation11 [shape = 'u32[0]{0}', space=smem, size = 0, offset = 0, fixed_abs, tag = 'smem constant byte address 0x0 - null']
  #allocation12 [shape = 's32[]', space=sflag, size = 0x4, offset = 0, fixed_abs, tag = 'sflag constant byte address 0x0 - dummy sync flag']
  #allocation13 [shape = 'u32[0]{0}', space=smem, size = 0, offset = 0, fixed_abs, tag = 'smem constant byte address 0x0 - null']
  #allocation14 [shape = 's32[]', space=sflag, size = 0x4, offset = 0, fixed_abs, tag = 'sflag constant byte address 0x0 - dummy sync flag']
  #allocation15 [shape = 'u32[0]{0}', space=smem, size = 0, offset = 0, fixed_abs, tag = 'smem constant byte address 0x0 - null']
  #allocation16 [shape = 's32[]', space=sflag, size = 0x4, offset = 0, fixed_abs, tag = 'sflag constant byte address 0x0 - dummy sync flag']
  #allocation17 [shape = 'u32[0]{0}', space=smem, size = 0, offset = 0, fixed_abs, tag = 'smem constant byte address 0x0 - null']
  #allocation18 [shape = 's32[]', space=sflag, size = 0x4, offset = 0, fixed_abs, tag = 'sflag constant byte address 0x0 - dummy sync flag']
  #allocation19 [shape = 'u32[0]{0}', space=smem, size = 0, offset = 0, fixed_abs, tag = 'smem constant byte address 0x0 - null']
  #allocation20 [shape = 's32[]', space=sflag, size = 0x4, offset = 0, fixed_abs, tag = 'sflag constant byte address 0x0 - dummy sync flag']
  #allocation21 [shape = 'u32[0]{0}', space=smem, size = 0, offset = 0, fixed_abs, tag = 'smem constant byte address 0x0 - null']
  #allocation22 [shape = 's32[]', space=sflag, size = 0x4, offset = 0, fixed_abs, tag = 'sflag constant byte address 0x0 - dummy sync flag']
  #allocation23 [shape = 'u32[0]{0}', space=smem, size = 0, offset = 0, fixed_abs, tag = 'smem constant byte address 0x0 - null']
  %s0 = inlined_call_operand.hbm [shape: s32[4], index: 0, kind: input, shape index: {}]
  %s1 = inlined_call_operand.vmem [shape: s32[4], index: 1, kind: input, shape index: {}]
  %s2 = inlined_call_operand.vmem [shape: s32[4], index: 2, kind: input, shape index: {}]
  %s3 = inlined_call_operand.vmem [shape: s32[4], index: 3, kind: input, shape index: {}]
  %s4 = inlined_call_operand.hbm [shape: f32[52,128], index: 4, kind: input, shape index: {}]
  %s5 = inlined_call_operand.hbm [shape: f32[36,128], index: 5, kind: output, shape index: {}]
  %s6 = sld [smem:[#allocation0]]
  $region2: #{tpu_custom_call.1} parent=0
    _
  %s8 = ssub.s32 1, %s6
  %s9 = scalar_select 0, %s8, %s6
  %11 = dma.hbm_to_smem %s0, 16, [#allocation4], [#allocation3]
  %s12 = sshll.u32 %s1, 4
  %s13 = int_to_ptr.vmem [resolvable:$true] %s12
  %15 = dma.vmem_to_smem %s13, 16, [#allocation5], [#allocation3]
  %s16 = sshll.u32 %s2, 4
  %s17 = int_to_ptr.vmem [resolvable:$true] %s16
  %19 = dma.vmem_to_smem %s17, 16, [#allocation6], [#allocation3]
  %s20 = sshll.u32 %s3, 4
  %s21 = int_to_ptr.vmem [resolvable:$true] %s20
  %23 = dma.vmem_to_smem %s21, 16, [#allocation7], [#allocation3]
  %24 = dma.done [#allocation3], 64
  %25 = sfence
  %s26 = sld [smem:[#allocation4]]
  %s27 = sld [smem:[#allocation5]]
  %s28 = smul.addr %s26, 16
  %s29 = scalar_lea.hbm %s4, %s28
  %s30 = smul.addr %s27, 16
  %s31 = scalar_lea.hbm %s5, %s30
  %s33 = sshll.u32 1, 14
  %s34 = sxor.u32 4294967295, %s33
  %s37 = sshll.u32 3, 24
  %s38 = sxor.u32 4294967295, %s37
  %s39 = sand.u32 0, %s38
  %s41 = sor.u32 %s39, 0
  %44 = dma.general %s29, 128, %s31, [#allocation2], [#allocation8], [#allocation9], %s41, 0
  %s45 = sld [smem:[#allocation4 + $0x1]]
  %s46 = sld [smem:[#allocation5 + $0x1]]
  %s47 = smul.addr %s45, 16
  %s48 = scalar_lea.hbm %s4, %s47
  %s49 = smul.addr %s46, 16
  %s50 = scalar_lea.hbm %s5, %s49
  %s52 = sshll.u32 1, 14
  %s53 = sxor.u32 4294967295, %s52
  %s56 = sshll.u32 3, 24
  %s57 = sxor.u32 4294967295, %s56
  %s58 = sand.u32 0, %s57
  %s60 = sor.u32 %s58, 0
  %63 = dma.general %s48, 128, %s50, [#allocation2], [#allocation10], [#allocation11], %s60, 0
  %s64 = sld [smem:[#allocation4 + $0x2]]
  %s65 = sld [smem:[#allocation5 + $0x2]]
  %s66 = smul.addr %s64, 16
  %s67 = scalar_lea.hbm %s4, %s66
  %s68 = smul.addr %s65, 16
  %s69 = scalar_lea.hbm %s5, %s68
  %s71 = sshll.u32 1, 14
  %s72 = sxor.u32 4294967295, %s71
  %s75 = sshll.u32 3, 24
  %s76 = sxor.u32 4294967295, %s75
  %s77 = sand.u32 0, %s76
  %s79 = sor.u32 %s77, 0
  %82 = dma.general %s67, 128, %s69, [#allocation2], [#allocation12], [#allocation13], %s79, 0
  %s83 = sld [smem:[#allocation4 + $0x3]]
  %s84 = sld [smem:[#allocation5 + $0x3]]
  %s85 = smul.addr %s83, 16
  %s86 = scalar_lea.hbm %s4, %s85
  %s87 = smul.addr %s84, 16
  %s88 = scalar_lea.hbm %s5, %s87
  %s90 = sshll.u32 1, 14
  %s91 = sxor.u32 4294967295, %s90
  %s94 = sshll.u32 3, 24
  %s95 = sxor.u32 4294967295, %s94
  %s96 = sand.u32 0, %s95
  %s98 = sor.u32 %s96, 0
  %101 = dma.general %s86, 128, %s88, [#allocation2], [#allocation14], [#allocation15], %s98, 0
  %s102 = sld [smem:[#allocation6]]
  %s103 = sld [smem:[#allocation7]]
  %s104 = smul.addr %s102, 16
  %s105 = scalar_lea.hbm %s4, %s104
  %s106 = smul.addr %s103, 16
  %s107 = scalar_lea.hbm %s5, %s106
  %s109 = sshll.u32 1, 14
  %s110 = sxor.u32 4294967295, %s109
  %s113 = sshll.u32 3, 24
  %s114 = sxor.u32 4294967295, %s113
  %s115 = sand.u32 0, %s114
  %s117 = sor.u32 %s115, 0
  %120 = dma.general %s105, 16, %s107, [#allocation2], [#allocation16], [#allocation17], %s117, 0
  %s121 = sld [smem:[#allocation6 + $0x1]]
  %s122 = sld [smem:[#allocation7 + $0x1]]
  %s123 = smul.addr %s121, 16
  %s124 = scalar_lea.hbm %s4, %s123
  %s125 = smul.addr %s122, 16
  %s126 = scalar_lea.hbm %s5, %s125
  %s128 = sshll.u32 1, 14
  %s129 = sxor.u32 4294967295, %s128
  %s132 = sshll.u32 3, 24
  %s133 = sxor.u32 4294967295, %s132
  %s134 = sand.u32 0, %s133
  %s136 = sor.u32 %s134, 0
  %139 = dma.general %s124, 16, %s126, [#allocation2], [#allocation18], [#allocation19], %s136, 0
  %s140 = sld [smem:[#allocation6 + $0x2]]
  %s141 = sld [smem:[#allocation7 + $0x2]]
  %s142 = smul.addr %s140, 16
  %s143 = scalar_lea.hbm %s4, %s142
  %s144 = smul.addr %s141, 16
  %s145 = scalar_lea.hbm %s5, %s144
  %s147 = sshll.u32 1, 14
  %s148 = sxor.u32 4294967295, %s147
  %s151 = sshll.u32 3, 24
  %s152 = sxor.u32 4294967295, %s151
  %s153 = sand.u32 0, %s152
  %s155 = sor.u32 %s153, 0
  %158 = dma.general %s143, 16, %s145, [#allocation2], [#allocation20], [#allocation21], %s155, 0
  %s159 = sld [smem:[#allocation6 + $0x3]]
  %s160 = sld [smem:[#allocation7 + $0x3]]
  %s161 = smul.addr %s159, 16
  %s162 = scalar_lea.hbm %s4, %s161
  %s163 = smul.addr %s160, 16
  %s164 = scalar_lea.hbm %s5, %s163
  %s166 = sshll.u32 1, 14
  %s167 = sxor.u32 4294967295, %s166
  %s170 = sshll.u32 3, 24
  %s171 = sxor.u32 4294967295, %s170
  %s172 = sand.u32 0, %s171
  %s174 = sor.u32 %s172, 0
  %177 = dma.general %s162, 16, %s164, [#allocation2], [#allocation22], [#allocation23], %s174, 0
  %s178 = smul.u32 36, 1
  %s179 = sshll.u32 %s178, 4
  %180 = dma.done [#allocation2], %s179
  %181 = vsyncmov [#allocation2]
  %s182 = vpop.sfrf %181
  %p183 = scmp.eq.s32.totalorder %s182, 0
  %p184 = pneg %p183
  %186 = shalt.err (%p184)

</llo_original>
